<compile_context>
chip_gen: v7x
topology: tpu7x:2x2x1
jax: 0.10.0
libtpu: 0.0.40
codegen_flags: <defaults>
</compile_context>

<pallas_src>
import math

import jax
import jax.numpy as jnp
from jax.experimental import pallas as pl
from jax.experimental.pallas import tpu as pltpu


def _cdiv(a: int, b: int) -> int:
    return -(-a // b)


# ---------------------------------------------------------------------------
# Kernel: lane-dense flattened add.
#   x_ref / o_ref : (tb, tc),   pos_ref : (1, tc)
# pos broadcasts over the batch (sublane) axis; dtype cast happens in-kernel.
# ---------------------------------------------------------------------------
def _add_pos_kernel(x_ref, pos_ref, o_ref):
    o_ref[...] = x_ref[...] + pos_ref[...].astype(x_ref.dtype)


_VMEM_BUDGET = 20 * 1024 * 1024   # total double-buffered block bytes per stage
_VMEM_LIMIT = 32 * 1024 * 1024    # explicit scoped-VMEM limit (fits v5e/v6e/v7x)
_SMALL_TOTAL = 2 * 1024 * 1024    # below this, use a single grid step


def _choose_tiles(B: int, N: int, itemsize: int):
    """Pick (tb, tc) block sizes for the flattened (B, N) add (N % 128 == 0)."""
    per_row = 4 * N * itemsize        # double-buffered x-in + out, per batch row
    pos_cost = 2 * N * itemsize       # double-buffered pos row
    min_tb = min(B, 8)

    # Path A (preferred): full-width row slabs -> contiguous DMAs, unmasked stores.
    if min_tb * per_row + pos_cost <= _VMEM_BUDGET:
        tb_cap = (_VMEM_BUDGET - pos_cost) // per_row
        if tb_cap >= B:
            total = B * N * itemsize
            if total <= _SMALL_TOTAL or B < 16 or B % 16 != 0:
                tb = B                 # single step: minimal per-step overhead
            else:
                tb = B // 2            # 2 even steps -> both v7x TCs get work
        else:
            tb = max(min_tb, (tb_cap // 8) * 8)
            steps = _cdiv(B, tb)
            if steps > 1 and steps % 2 == 1:
                # Nudge tb down (multiple of 8) to get an even step count so the
                # "parallel" batch axis balances across v7x's 2 TensorCores.
                tb_alt = ((_cdiv(B, steps + 1) + 7) // 8) * 8
                if 8 <= tb_alt <= tb_cap and _cdiv(B, tb_alt) % 2 == 0:
                    tb = tb_alt
        return tb, N

    # Path B: a single row is too wide for VMEM -> tile columns too (2-D grid).
    tb = min(B, 8)
    bytes_per_col = (4 * tb + 2) * itemsize
    tc = max(128, ((_VMEM_BUDGET // bytes_per_col) // 128) * 128)
    tc = min(tc, N)
    while N % tc != 0:
        tc -= 128
    return tb, tc


def _add_pos_flat(x2: jax.Array, pos2: jax.Array) -> jax.Array:
    """x2: (B, N), pos2: (1, N), with N a multiple of 128."""
    B, N = x2.shape
    itemsize = x2.dtype.itemsize
    tb, tc = _choose_tiles(B, N, itemsize)

    cost = pl.CostEstimate(
        flops=B * N,
        transcendentals=0,
        bytes_accessed=2 * B * N * itemsize + N * pos2.dtype.itemsize,
    )
    return pl.pallas_call(
        _add_pos_kernel,
        out_shape=jax.ShapeDtypeStruct((B, N), x2.dtype),
        grid=(_cdiv(B, tb), N // tc),
        in_specs=[
            pl.BlockSpec((tb, tc), lambda b, c: (b, c)),
            pl.BlockSpec((1, tc), lambda b, c: (0, c)),   # pos: constant along batch
        ],
        out_specs=pl.BlockSpec((tb, tc), lambda b, c: (b, c)),
        compiler_params=pltpu.CompilerParams(
            dimension_semantics=("parallel", "parallel"),
            vmem_limit_bytes=_VMEM_LIMIT,
        ),
        cost_estimate=cost,
    )(x2, pos2)


def positional_encoding(x: jax.Array, pos_embedding: jax.Array) -> jax.Array:
    """x: (..., S, D); pos_embedding: (S, D). Returns x + pos_embedding."""
    orig_shape = x.shape
    *lead, S, D = x.shape
    assert pos_embedding.shape == (S, D), (
        f"pos_embedding {pos_embedding.shape} must match x's trailing dims ({S}, {D})"
    )
    B = math.prod(lead) if lead else 1
    N = S * D

    x2 = x.reshape(B, N)                      # free: contiguous row-major reshape
    pos2 = pos_embedding.reshape(1, N)        # kept in its stored dtype; cast in-kernel

    if N % 128 != 0:
        # Pad the lane axis up to a multiple of 128 so every store stays a
        # full-width unmasked vst, then slice the padding back off.
        n_pad = _cdiv(N, 128) * 128
        x2 = jnp.pad(x2, ((0, 0), (0, n_pad - N)))
        pos2 = jnp.pad(pos2, ((0, 0), (0, n_pad - N)))
        out = _add_pos_flat(x2, pos2)[:, :N]
    else:
        out = _add_pos_flat(x2, pos2)

    return out.reshape(orig_shape)


if __name__ == "__main__":
    # Module config (small, consistent with __init__):
    #   seq = te_input_dim + size, d_model = hidden size
    te_input_dim, size, d_model = 6, 2, 32
    seq = te_input_dim + size              # 8
    batch = 2

    key = jax.random.PRNGKey(0)
    k_x, k_pos, k_x2, k_pos2 = jax.random.split(key, 4)

    # Deterministic "parameter": normal(std=0.2), matching
    # torch.empty(te_input_dim + size, d_model).normal_(std=0.2)
    pos_embedding = 0.2 * jax.random.normal(k_pos, (seq, d_model), dtype=jnp.float32)
    x = jax.random.normal(k_x, (batch, seq, d_model), dtype=jnp.float32)

    fwd = jax.jit(positional_encoding)
    out = fwd(x, pos_embedding)
    jax.block_until_ready(out)

    assert out.shape == (batch, seq, d_model)
    assert jnp.allclose(out, x + pos_embedding[None, :, :], atol=1e-6), "mismatch"

    # Also exercise the non-128-aligned (padded lane-dense) path.
    s2, d2 = 5, 20                         # S*D = 100, not a multiple of 128
    pos_b = 0.2 * jax.random.normal(k_pos2, (s2, d2), dtype=jnp.float32)
    x_b = jax.random.normal(k_x2, (batch, s2, d2), dtype=jnp.float32)
    out_b = jax.jit(positional_encoding)(x_b, pos_b)
    jax.block_until_ready(out_b)
    assert out_b.shape == (batch, s2, d2)
    assert jnp.allclose(out_b, x_b + pos_b[None, :, :], atol=1e-6), "mismatch (padded)"

    print("KERNEL_OK")
</pallas_src>

<mosaic_0001>
module attributes {stable_mosaic.version = 11 : i64} {
  func.func @_add_pos_kernel(%arg0: i32, %arg1: i32, %arg2: memref<2x256xf32, #tpu.memory_space<vmem>>, %arg3: memref<1x256xf32, #tpu.memory_space<vmem>>, %arg4: memref<2x256xf32, #tpu.memory_space<vmem>>) attributes {dimension_semantics = [#tpu.dimension_semantics<parallel>, #tpu.dimension_semantics<parallel>], iteration_bounds = array<i64: 1, 1>, scalar_prefetch = 0 : i64, scratch_operands = 0 : i64, tpu.core_type = #tpu.core_type<tc>, window_params = [{transform_indices = @transform_0, window_bounds = array<i64: 2, 256>}, {transform_indices = @transform_1, window_bounds = array<i64: 1, 256>}, {transform_indices = @transform_2, window_bounds = array<i64: 2, 256>}]} {
    %c0 = arith.constant 0 : index
    %c0_0 = arith.constant 0 : index
    %0 = vector.load %arg2[%c0, %c0_0] : memref<2x256xf32, #tpu.memory_space<vmem>>, vector<2x256xf32>
    %c0_1 = arith.constant 0 : index
    %c0_2 = arith.constant 0 : index
    %1 = vector.load %arg3[%c0_1, %c0_2] : memref<1x256xf32, #tpu.memory_space<vmem>>, vector<1x256xf32>
    %2 = vector.broadcast %1 : vector<1x256xf32> to vector<2x256xf32>
    %3 = arith.addf %0, %2 : vector<2x256xf32>
    %c0_3 = arith.constant 0 : index
    %c0_4 = arith.constant 0 : index
    %4 = vector.load %arg4[%c0_3, %c0_4] : memref<2x256xf32, #tpu.memory_space<vmem>>, vector<2x256xf32>
    tpu.vector_store %arg4[%c0_3, %c0_4], %3 {strides = array<i32>} : memref<2x256xf32, #tpu.memory_space<vmem>>, vector<2x256xf32>,
    return
  }
  func.func @transform_0(%arg0: i32, %arg1: i32) -> (i32, i32) {
    %c0_i32 = arith.constant 0 : i32
    return %arg0, %arg1 : i32, i32
  }
  func.func @transform_1(%arg0: i32, %arg1: i32) -> (i32, i32) {
    %c0_i32 = arith.constant 0 : i32
    %c0_i32_0 = arith.constant 0 : i32
    return %c0_i32, %arg1 : i32, i32
  }
  func.func @transform_2(%arg0: i32, %arg1: i32) -> (i32, i32) {
    %c0_i32 = arith.constant 0 : i32
    return %arg0, %arg1 : i32, i32
  }
}

</mosaic_0001>

<llo_original>
// kernel: positional_encoding.1
$region0: #{positional_encoding.1}
  #allocation0 [shape = 'u32[]', space=smem, size = 0x4, offset = 0x4, fixed_abs, tag = 'smem constant byte address 0x4 - core index']
  #allocation1 [shape = 'u32[144,128]{1,0:T(1,128)}', space=vmem, size = 0x12000, scoped, tag = 'internal scratch']
  %s0 = inlined_call_operand.vmem [shape: f32[2,256], index: 0, kind: input, shape index: {}]
  %s1 = inlined_call_operand.vmem [shape: f32[1,256], index: 1, kind: input, shape index: {}]
  %s2 = inlined_call_operand.vmem [shape: f32[2,256], index: 2, kind: output, shape index: {}]
  %s3 = sld [smem:[#allocation0]]
  $region18: #{positional_encoding.1} parent=0
    _
  %s5 = ssub.s32 1, %s3
  %s6 = scalar_select 0, %s5, %s3
  // Predicated region
  $region2: #{positional_encoding.1} parent=0 // pred_check
    _
  $region3: #{positional_encoding.1} parent=0 // pred_check_branch
    %8 = sbr.rel (0) target = $region5
  $region4: #{positional_encoding.1} parent=0 // pred_region
    _
  $region5: #{positional_encoding.1} parent=0 // pred_fallthru
    _
  // Predicated region
  $region6: #{positional_encoding.1} parent=0 // pred_check
    _
  $region7: #{positional_encoding.1} parent=0 // pred_check_branch
    %10 = sbr.rel (0) target = $region9
  $region8: #{positional_encoding.1} parent=0 // pred_region
    _
  $region9: #{positional_encoding.1} parent=0 // pred_fallthru
    _
  %v11 = vld [vmem:[%s0] sm:$0xf]
  %v12 = vld [vmem:[%s1] sm:$0x3]
  %v14 = vlaneseq
  %v15 = vshrl.u32 %v14, 7
  %v16 = vsub.s32 0, %v15
  %v17 = vrot.slane %v12, %v16
  %v18 = vlaneseq
  %v19 = vshrl.u32 %v18, 7
  %v20 = vsub.s32 1, %v19
  %v21 = vrot.slane %v12, %v20
  %v22 = vcombine.low %v17, %v21
  %v24 = vunpack.c.l.s4 1983009808
  %v25 = vunpack.c.0.s8 %v24
  %v26 = vlaneseq
  %v27 = vshrl.u32 %v26, 7
  %v28 = vsub.s32 %v25, %v27
  %v29 = vrot.slane %v22, %v28
  %v31 = vadd.f32 %v11, %v29
  %32 = vst [vmem:[%s2] sm:$0xf] %v31
  // Predicated region
  $region10: #{positional_encoding.1} parent=0 // pred_check
    _
  $region11: #{positional_encoding.1} parent=0 // pred_check_branch
    %34 = sbr.rel (0) target = $region13
  $region12: #{positional_encoding.1} parent=0 // pred_region
    _
  $region13: #{positional_encoding.1} parent=0 // pred_fallthru
    _
  // Predicated region
  $region14: #{positional_encoding.1} parent=0 // pred_check
    _
  $region15: #{positional_encoding.1} parent=0 // pred_check_branch
    %36 = sbr.rel (0) target = $region17
  $region16: #{positional_encoding.1} parent=0 // pred_region
    _
  $region17: #{positional_encoding.1} parent=0 // pred_fallthru
    _

</llo_original>
